<compile_context>
chip_gen: v6e
topology: v6e:2x2x1
jax: 0.10.0
libtpu: 0.0.40
codegen_flags: <defaults>
</compile_context>

<pallas_src>
import functools

import jax
import jax.numpy as jnp
from jax import lax
from jax.experimental import pallas as pl
from jax.experimental.pallas import tpu as pltpu


def _flatten_head_kernel(x_ref, w_ref, b_ref, o_ref):
    # x_ref: [TM, K]  activation tile (K = head_nf), streamed over the grid
    # w_ref: [K, N]   pre-transposed nn.Linear weight, loop-invariant
    # b_ref: [1, N]   bias, loop-invariant (f32)
    # o_ref: [TM, N]  output tile
    acc = jnp.dot(x_ref[...], w_ref[...], preferred_element_type=jnp.float32)
    acc = acc + b_ref[...].astype(jnp.float32)
    o_ref[...] = acc.astype(o_ref.dtype)


def _round_up(x, m):
    return ((x + m - 1) // m) * m


def _padded_vmem_bytes(rows, cols, itemsize):
    # VMEM footprint of a 2-D buffer: minor dim padded to 128 lanes, second-minor
    # padded to the sublane tile (8 rows of 32-bit; sub-32-bit dtypes pack more).
    sublane = 8 * (4 // itemsize)
    return _round_up(max(rows, 1), sublane) * _round_up(max(cols, 1), 128) * itemsize


def _vmem_capacity_bytes():
    # Generation-aware VMEM capacity (128 MiB v5e/v6e, 64 MiB per core on v7x).
    try:
        cap = int(pltpu.get_tpu_info().vmem_capacity_bytes)
        if cap > 0:
            return cap
    except Exception:
        pass
    return 64 * 1024 * 1024  # conservative fallback (v7x per-core VMEM)


def _pick_tile_m(m, head_nf, pred_len, in_itemsize, out_itemsize, vmem_cap):
    # Budget: stay well under physical VMEM, leaving room for compiler scratch.
    budget = min(vmem_cap // 2, 64 * 1024 * 1024)
    # Resident weight/bias are still double-buffered by the pipeline (their
    # index_map is constant so re-DMA is skipped, but 2 buffers are allocated).
    resident = (2 * _padded_vmem_bytes(head_nf, pred_len, in_itemsize)
                + 2 * _padded_vmem_bytes(1, pred_len, 4))
    # Streaming cost per row of M (x tile + output tile, double-buffered),
    # with the lane padding of head_nf / pred_len included.
    k_lanes = _round_up(head_nf, 128)
    n_lanes = _round_up(pred_len, 128)
    per_row = 2 * (k_lanes * in_itemsize + n_lanes * out_itemsize)
    avail = max(budget - resident, per_row * 16)
    tm = (avail // per_row // 16) * 16          # multiple of 16: safe for bf16 packing
    # v5e/v6e (128 MiB VMEM) can afford bigger tiles than v7x (64 MiB).
    tm_cap = 1024 if vmem_cap >= 96 * 1024 * 1024 else 512
    tm = max(16, min(tm, tm_cap))
    # Guarantee >= 2 grid steps when there is enough work, so the "parallel"
    # M axis actually shards across v7x's two TensorCores.
    if m >= 256:
        tm = min(tm, _round_up(-(-m // 2), 16))
    if m <= tm:
        tm = m          # single full-extent block (valid even if m % 8 != 0)
    # TODO(synk): if head_nf*pred_len ever outgrows the budget, add a K grid axis
    # ("arbitrary", VMEM f32 accumulator + pl.when init/finalize) instead of
    # shrinking TM further; likewise a pred_len grid axis would recover v7x
    # parallelism for tiny M.
    return tm


@functools.partial(jax.jit, static_argnames=("patch_nums",))
def flatten_head_forward(x, weight, bias, *, patch_nums):
    """
    x:      [B, n_vars, d_ff, total_patches]
    weight: [pred_len, head_nf]   (PyTorch nn.Linear convention, head_nf = d_ff*patch_nums)
    bias:   [pred_len]
    returns [B, pred_len, n_vars]
    """
    B, n_vars, d_ff, total_patches = x.shape
    pred_len, head_nf = weight.shape
    assert head_nf == d_ff * patch_nums

    M = B * n_vars
    out_dtype = x.dtype
    # bf16 feeds the MXU natively on all generations and halves the dominant
    # HBM stream; the accumulator stays f32 (small numerics delta accepted).
    compute_dtype = jnp.bfloat16 if jnp.issubdtype(x.dtype, jnp.floating) else x.dtype

    # Slice the last patch_nums patches + flatten (row-major, matching
    # torch.nn.Flatten(start_dim=-2): feature = d_ff_idx * patch_nums + p).
    # The slice + reshape + bf16 cast fuse into the single materialization of
    # x2d: x is read once in its input dtype, written once at half width, and
    # no pad/extra copy of x is ever made.
    if total_patches != patch_nums:
        x = lax.slice_in_dim(x, total_patches - patch_nums, total_patches, axis=3)
    x2d = x.reshape(M, head_nf).astype(compute_dtype)

    w_t = weight.T.astype(compute_dtype)              # (head_nf, pred_len) — one-time, loop-invariant
    b2d = bias.reshape(1, pred_len).astype(jnp.float32)

    in_itemsize = jnp.dtype(compute_dtype).itemsize
    out_itemsize = jnp.dtype(out_dtype).itemsize
    vmem_cap = _vmem_capacity_bytes()
    tm = _pick_tile_m(M, head_nf, pred_len, in_itemsize, out_itemsize, vmem_cap)
    grid_m = pl.cdiv(M, tm)     # ragged final tile: Pallas masks the boundary store

    footprint = (2 * _padded_vmem_bytes(tm, head_nf, in_itemsize)        # x, double-buffered
                 + 2 * _padded_vmem_bytes(tm, pred_len, out_itemsize)    # out, double-buffered
                 + 2 * _padded_vmem_bytes(head_nf, pred_len, in_itemsize)  # weight
                 + 2 * _padded_vmem_bytes(1, pred_len, 4))                 # bias
    vmem_limit = int(min(max(footprint + (8 << 20), 32 << 20),
                         max(vmem_cap - (16 << 20), 32 << 20)))

    cost = pl.CostEstimate(
        flops=2 * M * head_nf * pred_len,
        transcendentals=0,
        bytes_accessed=(M * head_nf * in_itemsize        # x stream
                        + head_nf * pred_len * in_itemsize  # weight (read once)
                        + pred_len * 4                       # bias
                        + M * pred_len * out_itemsize),      # output
    )

    out2d = pl.pallas_call(
        _flatten_head_kernel,
        out_shape=jax.ShapeDtypeStruct((M, pred_len), out_dtype),
        grid_spec=pltpu.PrefetchScalarGridSpec(
            num_scalar_prefetch=0,
            grid=(grid_m,),
            in_specs=[
                pl.BlockSpec((tm, head_nf), lambda i: (i, 0)),        # x tile streams over M
                pl.BlockSpec((head_nf, pred_len), lambda i: (0, 0)),  # weight resident (no re-DMA)
                pl.BlockSpec((1, pred_len), lambda i: (0, 0)),        # bias resident
            ],
            out_specs=pl.BlockSpec((tm, pred_len), lambda i: (i, 0)),
        ),
        compiler_params=pltpu.CompilerParams(
            dimension_semantics=("parallel",),   # shard M tiles across v7x's 2 TCs
            vmem_limit_bytes=vmem_limit,
        ),
        cost_estimate=cost,
    )(x2d, w_t, b2d)

    # Dropout is identity in eval mode.
    # TODO(synk): training-mode dropout (RNG masking + 1/(1-p) scaling) not implemented.
    out = out2d.reshape(B, n_vars, pred_len)
    return jnp.transpose(out, (0, 2, 1))          # [B, pred_len, n_vars]


if __name__ == "__main__":
    # Small config consistent with the module's __init__:
    configs = {
        "seq_len": 16,
        "stride": 4,
        "d_ff": 32,
        "enc_in": 4,
        "pred_len": 8,
        "dropout": 0.1,
    }
    patch_nums = int((configs["seq_len"] - configs["stride"]) / configs["stride"] + 2)  # 5
    head_nf = configs["d_ff"] * patch_nums                                              # 160
    n_vars = configs["enc_in"]
    pred_len = configs["pred_len"]

    B = 2
    total_patches = patch_nums + 1  # input has more patches than kept; module takes last patch_nums

    key = jax.random.PRNGKey(0)
    kx, kw, kb = jax.random.split(key, 3)

    x = jax.random.normal(kx, (B, n_vars, configs["d_ff"], total_patches), dtype=jnp.float32)
    weight = jax.random.normal(kw, (pred_len, head_nf), dtype=jnp.float32) * 0.02
    bias = jax.random.normal(kb, (pred_len,), dtype=jnp.float32) * 0.02

    out = flatten_head_forward(x, weight, bias, patch_nums=patch_nums)
    out = jax.block_until_ready(out)

    # Reference in plain JAX (same math as the PyTorch module, f32 end-to-end).
    x_sl = x[:, :, :, -patch_nums:].reshape(B * n_vars, head_nf)
    ref = (x_sl @ weight.T + bias).reshape(B, n_vars, pred_len).transpose(0, 2, 1)
    assert out.shape == (B, pred_len, n_vars)
    assert out.dtype == x.dtype
    # bf16 inputs (f32 accumulate) -> loosened tolerance vs. the f32 reference.
    assert jnp.allclose(out, ref, atol=2e-2, rtol=2e-2), float(jnp.max(jnp.abs(out - ref)))

    print("KERNEL_OK")
</pallas_src>

<mosaic_0001>
module attributes {stable_mosaic.version = 11 : i64} {
  func.func @_flatten_head_kernel(%arg0: i32, %arg1: memref<8x160xbf16, #tpu.memory_space<vmem>>, %arg2: memref<160x8xbf16, #tpu.memory_space<vmem>>, %arg3: memref<1x8xf32, #tpu.memory_space<vmem>>, %arg4: memref<8x8xf32, #tpu.memory_space<vmem>>) attributes {dimension_semantics = [#tpu.dimension_semantics<parallel>], iteration_bounds = array<i64: 1>, scalar_prefetch = 0 : i64, scratch_operands = 0 : i64, tpu.core_type = #tpu.core_type<tc>, window_params = [{transform_indices = @transform_0, window_bounds = array<i64: 8, 160>}, {pipeline_mode = #tpu.pipeline_mode<synchronous>, transform_indices = @transform_1, window_bounds = array<i64: 160, 8>}, {pipeline_mode = #tpu.pipeline_mode<synchronous>, transform_indices = @transform_2, window_bounds = array<i64: 1, 8>}, {transform_indices = @transform_3, window_bounds = array<i64: 8, 8>}]} {
    %c0 = arith.constant 0 : index
    %c0_0 = arith.constant 0 : index
    %0 = vector.load %arg1[%c0, %c0_0] : memref<8x160xbf16, #tpu.memory_space<vmem>>, vector<8x160xbf16>
    %c0_1 = arith.constant 0 : index
    %c0_2 = arith.constant 0 : index
    %1 = vector.load %arg2[%c0_1, %c0_2] : memref<160x8xbf16, #tpu.memory_space<vmem>>, vector<160x8xbf16>
    %cst = arith.constant dense<0.000000e+00> : vector<8x8xf32>
    %2 = tpu.matmul %0, %1, %cst {dimension_numbers = #tpu.dot_dimension_numbers<[1], [0], [0], [1], [0, 0, 1, 1], [], []>} : vector<8x160xbf16>, vector<160x8xbf16>, vector<8x8xf32> -> vector<8x8xf32>
    %c0_3 = arith.constant 0 : index
    %c0_4 = arith.constant 0 : index
    %3 = vector.load %arg3[%c0_3, %c0_4] : memref<1x8xf32, #tpu.memory_space<vmem>>, vector<1x8xf32>
    %4 = vector.broadcast %3 : vector<1x8xf32> to vector<8x8xf32>
    %5 = arith.addf %2, %4 : vector<8x8xf32>
    %c0_5 = arith.constant 0 : index
    %c0_6 = arith.constant 0 : index
    %6 = vector.load %arg4[%c0_5, %c0_6] : memref<8x8xf32, #tpu.memory_space<vmem>>, vector<8x8xf32>
    tpu.vector_store %arg4[%c0_5, %c0_6], %5 {strides = array<i32>} : memref<8x8xf32, #tpu.memory_space<vmem>>, vector<8x8xf32>,
    return
  }
  func.func @transform_0(%arg0: i32) -> (i32, i32) {
    %c0_i32 = arith.constant 0 : i32
    %c0_i32_0 = arith.constant 0 : i32
    return %arg0, %c0_i32 : i32, i32
  }
  func.func @transform_1(%arg0: i32) -> (i32, i32) {
    %c0_i32 = arith.constant 0 : i32
    %c0_i32_0 = arith.constant 0 : i32
    %c0_i32_1 = arith.constant 0 : i32
    return %c0_i32, %c0_i32_0 : i32, i32
  }
  func.func @transform_2(%arg0: i32) -> (i32, i32) {
    %c0_i32 = arith.constant 0 : i32
    %c0_i32_0 = arith.constant 0 : i32
    %c0_i32_1 = arith.constant 0 : i32
    return %c0_i32, %c0_i32_0 : i32, i32
  }
  func.func @transform_3(%arg0: i32) -> (i32, i32) {
    %c0_i32 = arith.constant 0 : i32
    %c0_i32_0 = arith.constant 0 : i32
    return %arg0, %c0_i32 : i32, i32
  }
}

</mosaic_0001>

<llo_original>
// kernel: flatten_head_forward.1
$region0: #{flatten_head_forward.1}
  #allocation0 [shape = 'u32[]', space=smem, size = 0x4, offset = 0x4, fixed_abs, tag = 'smem constant byte address 0x4 - core index']
  #allocation1 [shape = 'u32[144,128]{1,0:T(1,128)}', space=vmem, size = 0x12000, scoped, tag = 'internal scratch']
  %s0 = inlined_call_operand.vmem [shape: bf16[8,160], index: 0, kind: input, shape index: {}]
  %s1 = inlined_call_operand.vmem [shape: bf16[160,8], index: 1, kind: input, shape index: {}]
  %s2 = inlined_call_operand.vmem [shape: f32[1,8], index: 2, kind: input, shape index: {}]
  %s3 = inlined_call_operand.hbm [shape: f32[8,8], index: 3, kind: output, shape index: {}]
  %s4 = sld [smem:[#allocation0]]
  $region22: #{flatten_head_forward.1} parent=0
    _
  %s6 = ssub.s32 1, %s4
  %s7 = scalar_select 0, %s6, %s4
  $region1: #{flatten_head_forward.1} parent=0
    #allocation2 [shape = 'u8[4096]{0}', space=vmem, size = 0x1000, scoped, tag = 'output window, operand 0, single buffered']
    #allocation3 [shape = 's32[1]{0}', space=sflag, size = 0x4, scoped, tag = 'scoped memory for flatten_head_forward.1']
    %8 = vsyncpa [#allocation3], 0
    // Predicated region
    $region2: #{flatten_head_forward.1} parent=1 // pred_check
      _
    $region3: #{flatten_head_forward.1} parent=1 // pred_check_branch
      %10 = sbr.rel (0) target = $region5
    $region4: #{flatten_head_forward.1} parent=1 // pred_region
      _
    $region5: #{flatten_head_forward.1} parent=1 // pred_fallthru
      _
    // Predicated region
    $region6: #{flatten_head_forward.1} parent=1 // pred_check
      _
    $region7: #{flatten_head_forward.1} parent=1 // pred_check_branch
      %12 = sbr.rel (0) target = $region9
    $region8: #{flatten_head_forward.1} parent=1 // pred_region
      _
    $region9: #{flatten_head_forward.1} parent=1 // pred_fallthru
      _
    // Predicated region
    $region10: #{flatten_head_forward.1} parent=1 // pred_check
      _
    $region11: #{flatten_head_forward.1} parent=1 // pred_check_branch
      %14 = sbr.rel (0) target = $region13
    $region12: #{flatten_head_forward.1} parent=1 // pred_region
      _
    $region13: #{flatten_head_forward.1} parent=1 // pred_fallthru
      _
    %v16 = vld [vmem:[%s0] sm:$0xff]
    %v17 = vld [vmem:[%s1] sm:$0xf]
    %v18 = vld [vmem:[%s1 + $0x4] sm:$0xf]
    %v19 = vld [vmem:[%s1 + $0x8] sm:$0xf]
    %v20 = vld [vmem:[%s1 + $0xc] sm:$0xf]
    %v21 = vld [vmem:[%s1 + $0x10] sm:$0xf]
    %v22 = vld [vmem:[%s1 + $0x14] sm:$0xf]
    %v23 = vld [vmem:[%s1 + $0x18] sm:$0xf]
    %v24 = vld [vmem:[%s1 + $0x1c] sm:$0xf]
    %v25 = vld [vmem:[%s1 + $0x20] sm:$0xf]
    %v26 = vld [vmem:[%s1 + $0x24] sm:$0xf]
    %v27 = vld [vmem:[%s1 + $0x28] sm:$0xf]
    %v28 = vld [vmem:[%s1 + $0x2c] sm:$0xf]
    %v29 = vld [vmem:[%s1 + $0x30] sm:$0xf]
    %v30 = vld [vmem:[%s1 + $0x34] sm:$0xf]
    %v31 = vld [vmem:[%s1 + $0x38] sm:$0xf]
    %v32 = vld [vmem:[%s1 + $0x3c] sm:$0xf]
    %v33 = vld [vmem:[%s1 + $0x40] sm:$0xf]
    %v34 = vld [vmem:[%s1 + $0x44] sm:$0xf]
    %v35 = vld [vmem:[%s1 + $0x48] sm:$0xf]
    %v36 = vld [vmem:[%s1 + $0x4c] sm:$0xf]
    %v37 = vld [vmem:[%s2] sm:$0x1]
    %v39 = vlaneseq
    %v40 = vshrl.u32 %v39, 7
    %v41 = vsub.s32 0, %v40
    %v42 = vrot.slane %v37, %v41
    %v45 = vunpack.c.l.b16 %v16
    %v46 = vunpack.c.h.b16 %v16
    %v47 = vpack.c.b16 %v45, %v45
    %v48 = vpack.c.b16 %v46, %v46
    %v70 = vunpack.c.l.b16 %v17
    %v71 = vunpack.c.l.b16 %v18
    %v72 = vunpack.c.l.b16 %v19
    %v73 = vunpack.c.l.b16 %v20
    %v74 = vunpack.c.l.b16 %v21
    %v75 = vunpack.c.l.b16 %v22
    %v76 = vunpack.c.l.b16 %v23
    %v77 = vunpack.c.l.b16 %v24
    %v78 = vunpack.c.l.b16 %v25
    %v79 = vunpack.c.l.b16 %v26
    %v80 = vunpack.c.l.b16 %v27
    %v81 = vunpack.c.l.b16 %v28
    %v82 = vunpack.c.l.b16 %v29
    %v83 = vunpack.c.l.b16 %v30
    %v84 = vunpack.c.l.b16 %v31
    %v85 = vunpack.c.l.b16 %v32
    %v86 = vunpack.c.l.b16 %v33
    %v87 = vunpack.c.l.b16 %v34
    %v88 = vunpack.c.l.b16 %v35
    %v89 = vunpack.c.l.b16 %v36
    %v90 = vpack.c.b16 %v71, %v70
    %v91 = vpack.c.b16 %v73, %v72
    %v92 = vpack.c.b16 %v75, %v74
    %v93 = vpack.c.b16 %v77, %v76
    %v94 = vpack.c.b16 %v79, %v78
    %v95 = vpack.c.b16 %v81, %v80
    %v96 = vpack.c.b16 %v83, %v82
    %v97 = vpack.c.b16 %v85, %v84
    %v98 = vpack.c.b16 %v87, %v86
    %v99 = vpack.c.b16 %v89, %v88
    %vm110 = vcmask 261120
    %v112 = vsel %vm110, %v48, 0
    %114 = vmatprep.subr.bf16.mxu0 0
    %115 = vmatpush1.bf16.msra.mxu0 %v97
    %116 = vmatprep.subr.bf16.mxu0 0
    %117 = vmatpush1.bf16.msra.mxu0 %v96
    %118 = vmatprep.subr.bf16.mxu0 0
    %119 = vmatpush1.bf16.msra.mxu0 %v95
    %120 = vmatprep.subr.bf16.mxu0 0
    %121 = vmatpush1.bf16.msra.mxu0 %v94
    %122 = vmatprep.subr.bf16.mxu0 0
    %123 = vmatpush1.bf16.msra.mxu0 %v93
    %124 = vmatprep.subr.bf16.mxu0 0
    %125 = vmatpush1.bf16.msra.mxu0 %v92
    %126 = vmatprep.subr.bf16.mxu0 0
    %127 = vmatpush1.bf16.msra.mxu0 %v91
    %128 = vmatprep.subr.bf16.mxu0 0
    %129 = vmatpush1.bf16.msra.mxu0 %v90
    %130 = vmatprep.subr.bf16.mxu0 0
    %131 = vmatpush2.bf16.msra.mxu0 0
    %132 = vmatprep.subr.bf16.mxu0 0
    %133 = vmatpush2.bf16.msra.mxu0 0
    %134 = vmatprep.subr.bf16.mxu0 0
    %135 = vmatpush2.bf16.msra.mxu0 0
    %136 = vmatprep.subr.bf16.mxu0 0
    %137 = vmatpush2.bf16.msra.mxu0 0
    %138 = vmatprep.subr.bf16.mxu0 0
    %139 = vmatpush2.bf16.msra.mxu0 0
    %140 = vmatprep.subr.bf16.mxu0 0
    %141 = vmatpush2.bf16.msra.mxu0 0
    %142 = vmatprep.subr.bf16.mxu0 0
    %143 = vmatpush2.bf16.msra.mxu0 %v99
    %144 = vmatprep.subr.bf16.mxu0 0
    %145 = vmatpush2.bf16.msra.mxu0 %v98
    %146 = vmatprep.mubr.bf16.mxu0 %v112
    %147 = vmatmul.mubr.bf16.gmra.mxu0 %v47
    %v148 = vpop.f32.mrf.mxu0
    %v149 = vadd.f32 %v42, %v148
    %v150 = vpop.f32.mrf.mxu0
    %v151 = vpop.f32.mrf.mxu0
    %v152 = vpop.f32.mrf.mxu0
    %153 = vdwg.mxu0
    %vm154 = vcmask 64512
    %155 = vst.msk [vmem:[#allocation2] sm:$0xff] %vm154, %v149
    // Predicated region
    $region14: #{flatten_head_forward.1} parent=1 // pred_check
      _
    $region15: #{flatten_head_forward.1} parent=1 // pred_check_branch
      %157 = sbr.rel (0) target = $region17
    $region16: #{flatten_head_forward.1} parent=1 // pred_region
      %s159 = ssub.s32 128, 128
      %160 = vsyncadd [#allocation3], %s159
      %s162 = sshll.u32 [#allocation2], 4
      %s163 = int_to_ptr.vmem [resolvable:$true] %s162
      %165 = dma.vmem_to_hbm [thread:$0]  %s163, 128, %s3, [#allocation3]
    $region17: #{flatten_head_forward.1} parent=1 // pred_fallthru
      _
    // Predicated region
    $region18: #{flatten_head_forward.1} parent=1 // pred_check
      _
    $region19: #{flatten_head_forward.1} parent=1 // pred_check_branch
      %167 = sbr.rel (0) target = $region21
    $region20: #{flatten_head_forward.1} parent=1 // pred_region
      %168 = dma.done [#allocation3], 128
    $region21: #{flatten_head_forward.1} parent=1 // pred_fallthru
      _
    %169 = vsyncpa [#allocation3], 1

</llo_original>
